<compile_context>
chip_gen: v7x
topology: tpu7x:2x2x1
jax: 0.10.0
libtpu: 0.0.40
codegen_flags: <defaults>
</compile_context>

<pallas_src>
import jax
import jax.numpy as jnp
from jax.experimental import pallas as pl
from jax.experimental.pallas import tpu as pltpu


_VMEM_LIMIT = 48 * 1024 * 1024  # < v7x 64 MiB physical VMEM; plenty of headroom on v5e/v6e


# ---------------------------------------------------------------------------
# Kernel A: per-head QKV projection.  qkv slab c = which*H + h  (which in {q,k,v}).
# ---------------------------------------------------------------------------
def _qkv_proj_kernel(x_ref, w_ref, o_ref):
    # x_ref: (1, tn, D) bf16 ; w_ref: (1, D, Dh) bf16 ; o_ref: (1, 1, tn, Dh) bf16
    o_ref[0, 0] = jnp.dot(x_ref[0], w_ref[0],
                          preferred_element_type=jnp.float32).astype(o_ref.dtype)


# ---------------------------------------------------------------------------
# Kernel B: flash attention with online softmax (kv tiles = innermost reduction axis).
# ---------------------------------------------------------------------------
def _flash_attn_kernel(q_ref, k_ref, v_ref, o_ref, m_sc, l_sc, acc_sc):
    # q_ref/k_ref/v_ref: (1, 1, t, Dh) bf16 slabs; softmax scale already folded into W_q.
    ki = pl.program_id(3)

    @pl.when(ki == 0)
    def _():
        m_sc[...] = jnp.full_like(m_sc, -jnp.inf)
        l_sc[...] = jnp.zeros_like(l_sc)
        acc_sc[...] = jnp.zeros_like(acc_sc)

    q = q_ref[0, 0]   # (tq, Dh) bf16
    k = k_ref[0, 0]   # (tk, Dh) bf16
    v = v_ref[0, 0]   # (tk, Dh) bf16

    # s = q @ k^T on the MXU with f32 accumulation; all softmax math stays f32.
    s = jax.lax.dot_general(q, k, (((1,), (1,)), ((), ())),
                            preferred_element_type=jnp.float32)      # (tq, tk)

    m_prev = m_sc[...]
    m_new = jnp.maximum(m_prev, jnp.max(s, axis=-1, keepdims=True))
    alpha = jnp.exp(m_prev - m_new)
    p = jnp.exp(s - m_new)
    l_sc[...] = alpha * l_sc[...] + jnp.sum(p, axis=-1, keepdims=True)
    acc_sc[...] = alpha * acc_sc[...] + jnp.dot(
        p.astype(v.dtype), v, preferred_element_type=jnp.float32)
    m_sc[...] = m_new

    @pl.when(ki == pl.num_programs(3) - 1)
    def _():
        o_ref[0, 0] = (acc_sc[...] *
                       pl.reciprocal(l_sc[...], approx=True)).astype(o_ref.dtype)


# ---------------------------------------------------------------------------
# Kernel C: output projection with the head axis as the grid reduction, plus bias.
#           y[b, n, :] = sum_h out[h, b, n, :] @ W_o[h] + bias    (Dropout p=0 -> identity)
# ---------------------------------------------------------------------------
def _out_proj_kernel(oh_ref, w_ref, b_ref, y_ref, acc_ref):
    # oh_ref: (1, 1, tn, Dh) bf16 ; w_ref: (1, Dh, D) bf16 ; b_ref: (1, D) f32
    h = pl.program_id(2)

    @pl.when(h == 0)
    def _():
        acc_ref[...] = jnp.zeros_like(acc_ref)

    acc_ref[...] += jnp.dot(oh_ref[0, 0], w_ref[0],
                            preferred_element_type=jnp.float32)

    @pl.when(h == pl.num_programs(2) - 1)
    def _():
        y_ref[0] = (acc_ref[...] + b_ref[...]).astype(y_ref.dtype)


def _seq_tile(n, target=256):
    """Sequence tile that divides n; small sequences use one whole-sequence tile."""
    if n % target == 0:
        return target
    if n % 128 == 0:
        return 128
    return n


def attention_forward(x, w_qkv, w_out, b_out, *, heads, dim_head):
    """Matches PyTorch Attention.forward.

    x: (B, N, D); w_qkv: (D, 3*H*Dh) [in x out]; w_out: (H*Dh, D) [in x out]; b_out: (D,).
    """
    B, N, D = x.shape
    H, Dh = heads, dim_head
    inner = H * Dh
    scale = dim_head ** (-0.5)
    out_dtype = x.dtype
    cdt = jnp.bfloat16  # MXU operand dtype (f32 accumulation inside the kernels)

    # ---- one-time weight prep (layout + scale folding), done once in XLA ----
    w_qkv = w_qkv.astype(jnp.float32)
    # Fold softmax scale into the q columns so the kernel never scales an NxN tensor.
    w_qkv = jnp.concatenate([w_qkv[:, :inner] * scale, w_qkv[:, inner:]], axis=-1)
    # (D, 3*H*Dh) -> (3*H, D, Dh): slab index c = which*H + h.
    w3 = w_qkv.reshape(D, 3, H, Dh).transpose(1, 2, 0, 3).reshape(3 * H, D, Dh).astype(cdt)
    # (H*Dh, D) -> (H, Dh, D) head-major slabs for the head-reduction output projection.
    w_o = w_out.reshape(H, Dh, D).astype(cdt)
    b_o = b_out.reshape(1, D).astype(jnp.float32)

    xb = x.astype(cdt)
    tn = _seq_tile(N)
    tq = tn
    tk = tn
    nq, nk = N // tq, N // tk

    # ---- Kernel A: per-head QKV projection -> qkv (3H, B, N, Dh) ------------
    qkv = pl.pallas_call(
        _qkv_proj_kernel,
        out_shape=jax.ShapeDtypeStruct((3 * H, B, N, Dh), cdt),
        grid_spec=pltpu.PrefetchScalarGridSpec(
            num_scalar_prefetch=0,
            grid=(3 * H, B, N // tn),
            in_specs=[
                pl.BlockSpec((1, tn, D), lambda c, b, nt: (b, nt, 0)),
                pl.BlockSpec((1, D, Dh), lambda c, b, nt: (c, 0, 0)),
            ],
            out_specs=pl.BlockSpec((1, 1, tn, Dh), lambda c, b, nt: (c, b, nt, 0)),
        ),
        compiler_params=pltpu.CompilerParams(
            dimension_semantics=("parallel", "parallel", "parallel"),
            vmem_limit_bytes=_VMEM_LIMIT),
    )(xb, w3)

    # ---- Kernel B: flash attention, grid (B, H, q-tiles, kv-tiles) ----------
    o_heads = pl.pallas_call(
        _flash_attn_kernel,
        out_shape=jax.ShapeDtypeStruct((H, B, N, Dh), cdt),
        grid_spec=pltpu.PrefetchScalarGridSpec(
            num_scalar_prefetch=0,
            grid=(B, H, nq, nk),
            in_specs=[
                pl.BlockSpec((1, 1, tq, Dh), lambda b, h, qi, ki: (h, b, qi, 0)),
                pl.BlockSpec((1, 1, tk, Dh), lambda b, h, qi, ki: (H + h, b, ki, 0)),
                pl.BlockSpec((1, 1, tk, Dh), lambda b, h, qi, ki: (2 * H + h, b, ki, 0)),
            ],
            out_specs=pl.BlockSpec((1, 1, tq, Dh),
                                   lambda b, h, qi, ki: (h, b, qi, 0)),
            scratch_shapes=[
                pltpu.VMEM((tq, 1), jnp.float32),    # running max m
                pltpu.VMEM((tq, 1), jnp.float32),    # running denom l
                pltpu.VMEM((tq, Dh), jnp.float32),   # output accumulator
            ]),
        compiler_params=pltpu.CompilerParams(
            dimension_semantics=("parallel", "parallel", "parallel", "arbitrary"),
            vmem_limit_bytes=_VMEM_LIMIT),
    )(qkv, qkv, qkv)

    # ---- Kernel C: output projection (+bias), heads as reduction axis -------
    y = pl.pallas_call(
        _out_proj_kernel,
        out_shape=jax.ShapeDtypeStruct((B, N, D), out_dtype),
        grid_spec=pltpu.PrefetchScalarGridSpec(
            num_scalar_prefetch=0,
            grid=(B, N // tn, H),
            in_specs=[
                pl.BlockSpec((1, 1, tn, Dh), lambda b, nt, h: (h, b, nt, 0)),
                pl.BlockSpec((1, Dh, D), lambda b, nt, h: (h, 0, 0)),
                pl.BlockSpec((1, D), lambda b, nt, h: (0, 0)),
            ],
            out_specs=pl.BlockSpec((1, tn, D), lambda b, nt, h: (b, nt, 0)),
            scratch_shapes=[pltpu.VMEM((tn, D), jnp.float32)]),
        compiler_params=pltpu.CompilerParams(
            dimension_semantics=("parallel", "parallel", "arbitrary"),
            vmem_limit_bytes=_VMEM_LIMIT),
    )(o_heads, w_o, b_o)

    return y


def attention_reference(x, w_qkv, w_out, b_out, *, heads, dim_head):
    """Pure-JAX f32 reference mirroring the PyTorch forward."""
    B, N, D = x.shape
    inner = heads * dim_head
    scale = dim_head ** (-0.5)
    qkv = jnp.einsum('bnd,de->bne', x, w_qkv)
    q, k, v = jnp.split(qkv, 3, axis=-1)

    def to_heads(t):
        return t.reshape(B, N, heads, dim_head).transpose(0, 2, 1, 3)

    q, k, v = map(to_heads, (q, k, v))
    dots = jnp.einsum('bhnd,bhmd->bhnm', q, k) * scale
    attn = jax.nn.softmax(dots, axis=-1)
    out = jnp.einsum('bhnm,bhmd->bhnd', attn, v)
    out = out.transpose(0, 2, 1, 3).reshape(B, N, inner)
    return jnp.einsum('bne,ed->bnd', out, w_out) + b_out


if __name__ == "__main__":
    # Small shapes consistent with the module's forward: x is (batch, seq, dim).
    B, N, dim = 2, 8, 32
    heads, dim_head = 4, 16
    inner = heads * dim_head

    key = jax.random.PRNGKey(0)
    kx, kq, ko, kb = jax.random.split(key, 4)

    x = jax.random.normal(kx, (B, N, dim), dtype=jnp.float32)
    # nn.Linear(dim, inner*3, bias=False): weight stored transposed as (dim, 3*inner).
    w_qkv = jax.random.normal(kq, (dim, 3 * inner), dtype=jnp.float32) * (dim ** -0.5)
    # nn.Linear(inner, dim) with its default bias (bias=True).
    w_out = jax.random.normal(ko, (inner, dim), dtype=jnp.float32) * (inner ** -0.5)
    b_out = jax.random.normal(kb, (dim,), dtype=jnp.float32) * 0.02

    y = attention_forward(x, w_qkv, w_out, b_out, heads=heads, dim_head=dim_head)
    jax.block_until_ready(y)

    y_ref = attention_reference(x, w_qkv, w_out, b_out, heads=heads, dim_head=dim_head)
    max_err = float(jnp.max(jnp.abs(y - y_ref)))
    # bf16 MXU operands vs f32 reference -> loosened tolerance.
    assert jnp.allclose(y, y_ref, atol=5e-2, rtol=5e-2), f"mismatch: max abs err {max_err}"

    print("KERNEL_OK")
</pallas_src>

<mosaic_0001>
module attributes {stable_mosaic.version = 11 : i64} {
  func.func @_qkv_proj_kernel(%arg0: i32, %arg1: i32, %arg2: i32, %arg3: memref<1x8x32xbf16, #tpu.memory_space<vmem>>, %arg4: memref<1x32x16xbf16, #tpu.memory_space<vmem>>, %arg5: memref<1x1x8x16xbf16, #tpu.memory_space<vmem>>) attributes {dimension_semantics = [#tpu.dimension_semantics<parallel>, #tpu.dimension_semantics<parallel>, #tpu.dimension_semantics<parallel>], iteration_bounds = array<i64: 12, 2, 1>, scalar_prefetch = 0 : i64, scratch_operands = 0 : i64, tpu.core_type = #tpu.core_type<tc>, window_params = [{transform_indices = @transform_0, window_bounds = array<i64: 1, 8, 32>}, {transform_indices = @transform_1, window_bounds = array<i64: 1, 32, 16>}, {transform_indices = @transform_2, window_bounds = array<i64: 1, 1, 8, 16>}]} {
    %c0 = arith.constant 0 : index
    %c0_0 = arith.constant 0 : index
    %c0_1 = arith.constant 0 : index
    %0 = vector.load %arg3[%c0, %c0_0, %c0_1] : memref<1x8x32xbf16, #tpu.memory_space<vmem>>, vector<1x8x32xbf16>
    %1 = vector.shape_cast %0 : vector<1x8x32xbf16> to vector<8x32xbf16>
    %c0_2 = arith.constant 0 : index
    %c0_3 = arith.constant 0 : index
    %c0_4 = arith.constant 0 : index
    %2 = vector.load %arg4[%c0_2, %c0_3, %c0_4] : memref<1x32x16xbf16, #tpu.memory_space<vmem>>, vector<1x32x16xbf16>
    %3 = vector.shape_cast %2 : vector<1x32x16xbf16> to vector<32x16xbf16>
    %cst = arith.constant dense<0.000000e+00> : vector<8x16xf32>
    %4 = tpu.matmul %1, %3, %cst {dimension_numbers = #tpu.dot_dimension_numbers<[1], [0], [0], [1], [0, 0, 1, 1], [], []>} : vector<8x32xbf16>, vector<32x16xbf16>, vector<8x16xf32> -> vector<8x16xf32>
    %5 = arith.truncf %4 : vector<8x16xf32> to vector<8x16xbf16>
    %c0_5 = arith.constant 0 : index
    %c0_6 = arith.constant 0 : index
    %c0_7 = arith.constant 0 : index
    %c0_8 = arith.constant 0 : index
    %6 = vector.load %arg5[%c0_5, %c0_6, %c0_7, %c0_8] : memref<1x1x8x16xbf16, #tpu.memory_space<vmem>>, vector<1x1x8x16xbf16>
    %7 = vector.shape_cast %6 : vector<1x1x8x16xbf16> to vector<8x16xbf16>
    %8 = vector.shape_cast %5 : vector<8x16xbf16> to vector<1x1x8x16xbf16>
    tpu.vector_store %arg5[%c0_5, %c0_6, %c0_7, %c0_8], %8 {strides = array<i32>} : memref<1x1x8x16xbf16, #tpu.memory_space<vmem>>, vector<1x1x8x16xbf16>,
    return
  }
  func.func @transform_0(%arg0: i32, %arg1: i32, %arg2: i32) -> (i32, i32, i32) {
    %c0_i32 = arith.constant 0 : i32
    %c0_i32_0 = arith.constant 0 : i32
    return %arg1, %arg2, %c0_i32 : i32, i32, i32
  }
  func.func @transform_1(%arg0: i32, %arg1: i32, %arg2: i32) -> (i32, i32, i32) {
    %c0_i32 = arith.constant 0 : i32
    %c0_i32_0 = arith.constant 0 : i32
    %c0_i32_1 = arith.constant 0 : i32
    return %arg0, %c0_i32, %c0_i32_0 : i32, i32, i32
  }
  func.func @transform_2(%arg0: i32, %arg1: i32, %arg2: i32) -> (i32, i32, i32, i32) {
    %c0_i32 = arith.constant 0 : i32
    %c0_i32_0 = arith.constant 0 : i32
    return %arg0, %arg1, %arg2, %c0_i32 : i32, i32, i32, i32
  }
}

</mosaic_0001>

<llo_original>
// kernel: tpu_custom_call.1
$region0: #{tpu_custom_call.1}
  #allocation0 [shape = 'u32[]', space=smem, size = 0x4, offset = 0x4, fixed_abs, tag = 'smem constant byte address 0x4 - core index']
  #allocation1 [shape = 'u32[144,128]{1,0:T(1,128)}', space=vmem, size = 0x12000, scoped, tag = 'internal scratch']
  %s0 = inlined_call_operand.vmem [shape: bf16[2,8,32], index: 0, kind: input, shape index: {}]
  %s1 = inlined_call_operand.vmem [shape: bf16[12,32,16], index: 1, kind: input, shape index: {}]
  %s2 = inlined_call_operand.hbm [shape: bf16[12,2,8,16], index: 2, kind: output, shape index: {}]
  %s3 = sld [smem:[#allocation0]]
  $region41: #{tpu_custom_call.1} parent=0
    _
  %s5 = ssub.s32 1, %s3
  %s6 = scalar_select 0, %s5, %s3
  $region1: #{tpu_custom_call.1} parent=0
    #allocation2 [shape = 'u8[4096]{0}', space=vmem, size = 0x1000, scoped, tag = 'output window, operand 0']
    #allocation3 [shape = 's32[2]{0}', space=sflag, size = 0x8, scoped, tag = 'scoped memory for tpu_custom_call.1']
    %7 = vsyncpa [#allocation3], 0
    %s8 = scalar_lea.sflag [#allocation3], 1
    %9 = vsyncpa %s8, 0
    loop: start=0, step=1, limit=26
    $region2: #{tpu_custom_call.1} parent=1 // loop_pre_header
      _
    $region3: #{tpu_custom_call.1} parent=1 // loop_header
      %s11 = sphi 0, %s15
      %p12 = scmp.ge.s32.totalorder %s11, 26
      %s18 = sphi 0, %s37
      %s19 = sphi 0, %s33
      %s20 = sphi 0, %s29
      %s21 = sphi 0, %s18
      %s22 = sphi 0, %s19
      %s23 = sphi 0, %s20
      %s24 = sphi 0, %s21
      %s25 = sphi 0, %s22
      %s26 = sphi 0, %s23
      %s42 = sphi 0, %s44
      %s45 = sphi 0, %s42
      %s46 = sphi 0, %s45
      %s62 = sphi 0, %s46
      %s68 = sphi 0, %s70
      %s71 = sphi 0, %s68
      %s72 = sphi 0, %s71
      %s88 = sphi 0, %s72
      %s98 = sphi 0, %s100
      %s101 = sphi 0, %s98
      %s102 = sphi 0, %s101
      %s118 = sphi 0, %s102
    $region4: #{tpu_custom_call.1} parent=1 // loop_header_branch
      %14 = sbr.rel (%p12) target = $region8
    $region5: #{tpu_custom_call.1} parent=1 // loop_body
      %s16 = ssub.s32 %s11, 1
      %s17 = ssub.s32 %s11, 2
      %s27 = sadd.s32 1, %s20
      %p28 = scmp.ge.s32.totalorder %s27, 1
      %s29 = scalar_select %p28, 0, %s27
      %s30 = sadd.s32 1, %s19
      %s31 = scalar_select %p28, %s30, %s19
      %p32 = scmp.ge.s32.totalorder %s31, 2
      %s33 = scalar_select %p32, 0, %s31
      %s34 = sadd.s32 1, %s18
      %s35 = scalar_select %p32, %s34, %s18
      %p36 = scmp.ge.s32.totalorder %s35, 12
      %s37 = scalar_select %p36, 0, %s35
      %s38 = ssub.s32 %s19, %s33
      %s39 = ssub.s32 %s20, %s29
      %s40 = sor.u32 %s38, %s39
      %p41 = scmp.eq.s32.totalorder %s40, 0
      %s43 = sadd.s32 %s42, 1
      %s44 = scalar_select %p41, %s42, %s43
      %p47 = pneg %p41
      %p48 = scmp.eq.s32.totalorder %s11, 23
      %p49 = por %p47, %p48
      %p50 = scmp.ne.s32.totalorder %s42, %s45
      %p51 = scmp.eq.s32.totalorder %s11, 0
      %p52 = por %p50, %p51
      %p53 = scmp.ne.s32.totalorder %s42, %s45
      %p54 = scmp.eq.s32.totalorder %s16, 23
      %p55 = por %p53, %p54
      %p56 = scmp.ne.s32.totalorder %s45, %s46
      %p57 = scmp.eq.s32.totalorder %s16, 0
      %p58 = por %p56, %p57
      %p59 = scmp.ne.s32.totalorder %s45, %s46
      %p60 = scmp.eq.s32.totalorder %s17, 23
      %p61 = por %p59, %p60
      %p63 = scmp.ne.s32.totalorder %s46, %s62
      %p64 = scmp.eq.s32.totalorder %s17, 0
      %p65 = por %p63, %p64
      %s66 = ssub.s32 %s18, %s37
      %p67 = scmp.eq.s32.totalorder %s66, 0
      %s69 = sadd.s32 %s68, 1
      %s70 = scalar_select %p67, %s68, %s69
      %p73 = pneg %p67
      %p74 = scmp.eq.s32.totalorder %s11, 23
      %p75 = por %p73, %p74
      %p76 = scmp.ne.s32.totalorder %s68, %s71
      %p77 = scmp.eq.s32.totalorder %s11, 0
      %p78 = por %p76, %p77
      %p79 = scmp.ne.s32.totalorder %s68, %s71
      %p80 = scmp.eq.s32.totalorder %s16, 23
      %p81 = por %p79, %p80
      %p82 = scmp.ne.s32.totalorder %s71, %s72
      %p83 = scmp.eq.s32.totalorder %s16, 0
      %p84 = por %p82, %p83
      %p85 = scmp.ne.s32.totalorder %s71, %s72
      %p86 = scmp.eq.s32.totalorder %s17, 23
      %p87 = por %p85, %p86
      %p89 = scmp.ne.s32.totalorder %s72, %s88
      %p90 = scmp.eq.s32.totalorder %s17, 0
      %p91 = por %p89, %p90
      %s92 = ssub.s32 %s18, %s37
      %s93 = ssub.s32 %s19, %s33
      %s94 = sor.u32 %s92, %s93
      %s95 = ssub.s32 %s20, %s29
      %s96 = sor.u32 %s94, %s95
      %p97 = scmp.eq.s32.totalorder %s96, 0
      %s99 = sadd.s32 %s98, 1
      %s100 = scalar_select %p97, %s98, %s99
      %p103 = pneg %p97
      %p104 = scmp.eq.s32.totalorder %s11, 23
      %p105 = por %p103, %p104
      %p106 = scmp.ne.s32.totalorder %s98, %s101
      %p107 = scmp.eq.s32.totalorder %s11, 0
      %p108 = por %p106, %p107
      %p109 = scmp.ne.s32.totalorder %s98, %s101
      %p110 = scmp.eq.s32.totalorder %s16, 23
      %p111 = por %p109, %p110
      %p112 = scmp.ne.s32.totalorder %s101, %s102
      %p113 = scmp.eq.s32.totalorder %s16, 0
      %p114 = por %p112, %p113
      %p115 = scmp.ne.s32.totalorder %s101, %s102
      %p116 = scmp.eq.s32.totalorder %s17, 23
      %p117 = por %p115, %p116
      %p119 = scmp.ne.s32.totalorder %s102, %s118
      %p120 = scmp.eq.s32.totalorder %s17, 0
      %p121 = por %p119, %p120
      %p122 = scmp.le.s32.totalorder 1, %s11
      %p123 = scmp.lt.s32.totalorder %s11, 25
      %p124 = pnand %p122, %p123
      %p125 = pneg %p124
      // Predicated region
      $region9: #{tpu_custom_call.1} parent=5 // pred_check
        _
      $region10: #{tpu_custom_call.1} parent=5 // pred_check_branch
        %127 = sbr.rel (%p124) target = $region12
      $region11: #{tpu_custom_call.1} parent=5 // pred_region
        %s128 = ssub.s32 %s11, 1
      $region12: #{tpu_custom_call.1} parent=5 // pred_fallthru
        _
      %p129 = scmp.lt.s32.totalorder %s11, 24
      // Predicated region
      $region13: #{tpu_custom_call.1} parent=5 // pred_check
        %p130 = pneg %p129
      $region14: #{tpu_custom_call.1} parent=5 // pred_check_branch
        %132 = sbr.rel (%p130) target = $region16
      $region15: #{tpu_custom_call.1} parent=5 // pred_region
        // Predicated region
        $region17: #{tpu_custom_call.1} parent=15 // pred_check
          %p133 = pneg %p52
        $region18: #{tpu_custom_call.1} parent=15 // pred_check_branch
          %135 = sbr.rel (%p133) target = $region20
        $region19: #{tpu_custom_call.1} parent=15 // pred_region
          %p136 = scmp.lt.s32.totalorder %s19, 1
          %s137 = scalar_select %p136, %s19, 1
          %p138 = scmp.lt.s32.totalorder %s20, 0
          %s139 = scalar_select %p138, %s20, 0
          %s140 = sadd.s32 %s139, %s137
          %s141 = smul.addr %s140, 4
          %s142 = scalar_lea.vmem %s0, %s141
        $region20: #{tpu_custom_call.1} parent=15 // pred_fallthru
          _
        // Predicated region
        $region21: #{tpu_custom_call.1} parent=15 // pred_check
          %p143 = pneg %p78
        $region22: #{tpu_custom_call.1} parent=15 // pred_check_branch
          %145 = sbr.rel (%p143) target = $region24
        $region23: #{tpu_custom_call.1} parent=15 // pred_region
          %p146 = scmp.lt.s32.totalorder %s18, 11
          %s147 = scalar_select %p146, %s18, 11
          %s148 = smul.addr %s147, 4
          %s149 = smul.addr %s148, 4
          %s150 = scalar_lea.vmem %s1, %s149
        $region24: #{tpu_custom_call.1} parent=15 // pred_fallthru
          _
      $region16: #{tpu_custom_call.1} parent=5 // pred_fallthru
        _
      %p151 = scmp.le.s32.totalorder 1, %s11
      %p152 = scmp.lt.s32.totalorder %s11, 25
      %p153 = pnand %p151, %p152
      %p154 = pneg %p153
      // Predicated region
      $region25: #{tpu_custom_call.1} parent=5 // pred_check
        _
      $region26: #{tpu_custom_call.1} parent=5 // pred_check_branch
        %156 = sbr.rel (%p153) target = $region28
      $region27: #{tpu_custom_call.1} parent=5 // pred_region
        %s157 = ssub.s32 %s11, 1
        %p158 = scmp.lt.s32.totalorder %s22, 1
        %s159 = scalar_select %p158, %s22, 1
        %p160 = scmp.lt.s32.totalorder %s23, 0
        %s161 = scalar_select %p160, %s23, 0
        %s162 = sadd.s32 %s161, %s159
        %s163 = smul.addr %s162, 4
        %s164 = scalar_lea.vmem %s0, %s163
        %p165 = pneg %p58
        %p166 = pneg %p55
        %p167 = scmp.lt.s32.totalorder %s21, 11
        %s168 = scalar_select %p167, %s21, 11
        %s169 = smul.addr %s168, 4
        %s170 = smul.addr %s169, 4
        %s171 = scalar_lea.vmem %s1, %s170
        %p172 = pneg %p84
        %p173 = pneg %p81
        %p174 = pneg %p114
        %p175 = pneg %p111
        %s176 = sand.u32 %s101, 1
        %s177 = scalar_lea.sflag [#allocation3], %s176
        %s178 = sand.u32 %s101, 1
        %s179 = smul.addr %s178, 4
        %s180 = scalar_lea.vmem [#allocation2], %s179
        %p181 = scmp.lt.s32.totalorder %s22, 1
        %s182 = scalar_select %p181, %s22, 1
        %p183 = scmp.lt.s32.totalorder %s23, 0
        %s184 = scalar_select %p183, %s23, 0
        %s185 = sadd.s32 %s184, %s182
        %s186 = smul.addr %s185, 4
        %s187 = scalar_lea.vmem %s0, %s186
        %p188 = scmp.lt.s32.totalorder %s21, 11
        %s189 = scalar_select %p188, %s21, 11
        %s190 = smul.addr %s189, 4
        %s191 = smul.addr %s190, 4
        %s192 = scalar_lea.vmem %s1, %s191
        %v194 = vld [vmem:[%s187] sm:$0xf]
        %v195 = vld [vmem:[%s192] sm:$0xf]
        %v196 = vld [vmem:[%s192 + $0x4] sm:$0xf]
        %v197 = vld [vmem:[%s192 + $0x8] sm:$0xf]
        %v198 = vld [vmem:[%s192 + $0xc] sm:$0xf]
        %v203 = vunpack.c.l.b16 %v195
        %v204 = vunpack.c.l.b16 %v196
        %v205 = vunpack.c.l.b16 %v197
        %v206 = vunpack.c.l.b16 %v198
        %v207 = vpack.c.b16 %v204, %v203
        %v208 = vpack.c.b16 %v206, %v205
        %vm211 = vcmask 261120
        %v213 = vsel %vm211, %v194, 0
        %215 = vmatprep.subr.bf16.mxu0 0
        %216 = vmatpush1.bf16.msra.mxu0 %v207
        %217 = vmatprep.subr.bf16.mxu0 0
        %218 = vmatpush1.bf16.msra.mxu0 %v208
        %219 = vmatprep.subr.bf16.mxu0 0
        %220 = vmatpush1.bf16.msra.mxu0 0
        %221 = vmatprep.subr.bf16.mxu0 0
        %222 = vmatpush1.bf16.msra.mxu0 0
        %223 = vmatprep.subr.bf16.mxu0 0
        %224 = vmatpush1.bf16.msra.mxu0 0
        %225 = vmatprep.subr.bf16.mxu0 0
        %226 = vmatpush1.bf16.msra.mxu0 0
        %227 = vmatprep.subr.bf16.mxu0 0
        %228 = vmatpush1.bf16.msra.mxu0 0
        %229 = vmatprep.subr.bf16.mxu0 0
        %230 = vmatpush1.bf16.msra.mxu0 0
        %231 = vmatprep.subr.bf16.mxu0 0
        %232 = vmatpush1.bf16.msra.mxu0 0
        %233 = vmatprep.subr.bf16.mxu0 0
        %234 = vmatpush1.bf16.msra.mxu0 0
        %235 = vmatprep.subr.bf16.mxu0 0
        %236 = vmatpush1.bf16.msra.mxu0 0
        %237 = vmatprep.subr.bf16.mxu0 0
        %238 = vmatpush1.bf16.msra.mxu0 0
        %239 = vmatprep.subr.bf16.mxu0 0
        %240 = vmatpush1.bf16.msra.mxu0 0
        %241 = vmatprep.subr.bf16.mxu0 0
        %242 = vmatpush1.bf16.msra.mxu0 0
        %243 = vmatprep.subr.bf16.mxu0 0
        %244 = vmatpush1.bf16.msra.mxu0 0
        %245 = vmatprep.subr.bf16.mxu0 0
        %246 = vmatpush1.bf16.msra.mxu0 0
        %247 = vmatprep.mubr.bf16.mxu0 0
        %248 = vmatmul.mubr.bf16.gmra.mrb[0].mxu0 %v213
        %v249 = vpop.f32.mrb[0].mxu0
        %v250 = vadd.f32 0.0, %v249
        %v251 = vpop.f32.mrb[0].mxu0
        %v252 = vpop.f32.mrb[0].mxu0
        %v253 = vpop.f32.mrb[0].mxu0
        %254 = vdwg.mxu0
        %v255 = vpack.c.bf16 %v250, %v250
        %vm256 = vcmask 125952
        %257 = vst.msk [vmem:[%s180] sm:$0xf] %vm256, %v255
        %s258 = sand.u32 %s101, 1
        %s259 = scalar_lea.sflag [#allocation3], %s258
        %s260 = sand.u32 %s101, 1
        %s261 = smul.addr %s260, 4
        %s262 = scalar_lea.vmem [#allocation2], %s261
        // Predicated region
        $region29: #{tpu_custom_call.1} parent=27 // pred_check
          %p263 = pneg %p111
        $region30: #{tpu_custom_call.1} parent=27 // pred_check_branch
          %265 = sbr.rel (%p263) target = $region32
        $region31: #{tpu_custom_call.1} parent=27 // pred_region
          %s267 = ssub.s32 64, 64
          %268 = vsyncadd %s259, %s267
          %s269 = sadd.s32 %s23, %s22
          %s270 = smul.addr %s21, 2
          %s271 = sadd.s32 %s269, %s270
          %s272 = smul.addr %s271, 64
          %s273 = scalar_lea.hbm %s2, %s272
          %s275 = sshll.u32 %s262, 4
          %s276 = int_to_ptr.vmem [resolvable:$true] %s275
          %278 = dma.vmem_to_hbm [thread:$0]  %s276, 64, %s273, %s259
        $region32: #{tpu_custom_call.1} parent=27 // pred_fallthru
          _
      $region28: #{tpu_custom_call.1} parent=5 // pred_fallthru
        _
      %p279 = scmp.le.s32.totalorder 2, %s11
      // Predicated region
      $region33: #{tpu_custom_call.1} parent=5 // pred_check
        %p280 = pneg %p279
      $region34: #{tpu_custom_call.1} parent=5 // pred_check_branch
        %282 = sbr.rel (%p280) target = $region36
      $region35: #{tpu_custom_call.1} parent=5 // pred_region
        %s283 = ssub.s32 %s11, 2
        // Predicated region
        $region37: #{tpu_custom_call.1} parent=35 // pred_check
          %p284 = pneg %p117
        $region38: #{tpu_custom_call.1} parent=35 // pred_check_branch
          %286 = sbr.rel (%p284) target = $region40
        $region39: #{tpu_custom_call.1} parent=35 // pred_region
          %s287 = sand.u32 %s102, 1
          %s288 = scalar_lea.sflag [#allocation3], %s287
          %s289 = sand.u32 %s102, 1
          %s290 = smul.addr %s289, 4
          %s291 = scalar_lea.vmem [#allocation2], %s290
          %292 = dma.done %s288, 64
        $region40: #{tpu_custom_call.1} parent=35 // pred_fallthru
          _
      $region36: #{tpu_custom_call.1} parent=5 // pred_fallthru
        _
    $region6: #{tpu_custom_call.1} parent=1 // loop_footer
      %s15 = sadd.s32 1, %s11
    $region7: #{tpu_custom_call.1} parent=1 // loop_footer_branch
      %10 = sbr.rel target = $region3
    $region8: #{tpu_custom_call.1} parent=1 // loop_exit
      _
    %293 = vsyncpa [#allocation3], 1
    %s294 = scalar_lea.sflag [#allocation3], 1
    %295 = vsyncpa %s294, 1

</llo_original>
